<compile_context>
chip_gen: v5e
topology: v5e:2x2
jax: 0.10.0
libtpu: 0.0.40
codegen_flags: <defaults>
</compile_context>

<pallas_src>
import math
import jax
import jax.numpy as jnp
from jax import lax
from jax.experimental import pallas as pl
from jax.experimental.pallas import tpu as pltpu

# model sizes (small, consistent with the module)
B, F, S, H, L, CH = 2, 4, 8, 64, 2, 32   # batch, n_features, seq_length, hidden, n_layers, curl-hidden
BS = B * S                               # batch folded into sublanes
FP = 8                                   # feature dim zero-padded to 8 sublanes
W3 = 3 * H                               # slab lane width (fused qkv width = 192)

# ---- parameter-slab layout (header) ----
ROW_WIN = 0                              # FP rows, cols 0:H   (w_in; rows F..FP-1 are zero)
ROW_WOUT = 4                             # 1 row:   cols H:2H = w_out row, col 2H = b_out
ROW_TB = 8                               # BS rows: cols 0:H = temporal enc + b_in,
                                         #          cols 2H:2H+BS = block-diagonal attention mask
LAYER0 = ROW_TB + BS                     # 24 (8-aligned)

# ---- parameter-slab layout (per layer, relative to layer base) ----
OFF_WQKV = 0                             # H rows,  cols 0:3H  (wq/sqrt(H) | wk | wv@wo)
OFF_BQKV = H                             # 1 row,   cols 0:3H  (bq/sqrt(H) | bk | bv@wo+bo)
OFF_BMLP = H + 1                         # 1 row:   cols 0:CH = b1, cols 2H:3H = b2' = 0.1*b2@p_curl
OFF_W1 = H + 8                           # H rows,  cols 0:CH  = w1
OFF_W2 = H + 8                           # CH rows (shares W1 block), cols 2H:3H = w2' = 0.1*w2@p_curl
LAYER_STRIDE = OFF_W1 + H                # 136 rows per layer
TOTAL_ROWS = LAYER0 + L * LAYER_STRIDE   # 296 rows  (296*192*4 B ~= 222 KiB)


def temporal_encoding(t):
    """Continuous temporal encoding, matching SE3ContiFormer.temporal_encoding."""
    i = jnp.arange(H)
    position_vec = jnp.power(10000.0, 2.0 * (i // 2).astype(jnp.float32) / H).astype(jnp.float32)
    r = t[..., None] / position_vec                       # (B, S, H)
    return jnp.where(i % 2 == 0, jnp.sin(r), jnp.cos(r)).astype(jnp.float32)


def _se3_contiformer_kernel(x_ref, p_ref, out_ref):
    x = x_ref[...]                                        # (BS, FP)

    # input projection + (temporal encoding + b_in), both baked into the slab
    w_in = p_ref[ROW_WIN:ROW_WIN + FP, 0:H]               # (FP, H)
    tb = p_ref[ROW_TB:ROW_TB + BS, 0:H]                   # (BS, H)
    feat = jnp.dot(x, w_in, preferred_element_type=jnp.float32) + tb

    # block-diagonal attention mask (batch folded into sublanes; no cross-batch attention)
    mask = p_ref[ROW_TB:ROW_TB + BS, 2 * H:2 * H + BS]    # (BS, BS) f32 {0,1}

    for l in range(L):                                    # static unrolled loop over layers
        base = LAYER0 + l * LAYER_STRIDE
        wqkv = p_ref[base + OFF_WQKV: base + OFF_WQKV + H, :]    # (H, 3H)
        bqkv = p_ref[base + OFF_BQKV: base + OFF_BQKV + 1, :]    # (1, 3H)

        # fused q | k | (v @ wo) projection, single MXU op
        qkv = jnp.dot(feat, wqkv, preferred_element_type=jnp.float32) + bqkv    # (BS, 3H)
        q = qkv[:, 0:H]                   # already pre-scaled by 1/sqrt(H)
        k = qkv[:, H:2 * H]
        vo = qkv[:, 2 * H:3 * H]          # = feat @ (wv@wo) + (bv@wo + bo)

        # q . k^T without materializing a transpose: contract both on their last dim
        scores = lax.dot_general(q, k, dimension_numbers=(((1,), (1,)), ((), ())),
                                 preferred_element_type=jnp.float32)            # (BS, BS)
        # masked softmax as multiplies (no -1e30 sentinel): zeroing cross-batch scores before
        # the row max keeps exp() arguments <= 0, and multiplying e by the mask zeroes them out.
        scores = scores * mask
        scores = scores - jnp.max(scores, axis=-1, keepdims=True)
        e = jnp.exp(scores) * mask
        attn = e * pl.reciprocal(jnp.sum(e, axis=-1, keepdims=True), approx=True)
        ao = jnp.dot(attn, vo, preferred_element_type=jnp.float32)              # (BS, H)
        # (attention rows sum to ~1 (approx reciprocal), so the folded bv@wo+bo bias is
        #  carried through to ~1e-4 relative error — covered by the test tolerance)

        # divergence-free dynamics stand-in; 0.1 * p_curl folded into w2'/b2' at pack time
        w1 = p_ref[base + OFF_W1: base + OFF_W1 + H, 0:CH]            # (H, CH)
        w2p = p_ref[base + OFF_W2: base + OFF_W2 + CH, 2 * H:3 * H]   # (CH, H)
        b1 = p_ref[base + OFF_BMLP: base + OFF_BMLP + 1, 0:CH]        # (1, CH)
        b2p = p_ref[base + OFF_BMLP: base + OFF_BMLP + 1, 2 * H:3 * H]  # (1, H)
        h = jnp.tanh(jnp.dot(ao, w1, preferred_element_type=jnp.float32) + b1)
        ode = jnp.dot(h, w2p, preferred_element_type=jnp.float32) + b2p          # = 0.1 * curl-diff

        feat = feat + ao + ode            # residual connection from SE3ContiFormer.forward

    # output projection for all rows: VPU multiply + lane reduction (last-timestep rows are
    # selected in the wrapper, avoiding in-kernel single-row gathers / concatenates)
    w_out = p_ref[ROW_WOUT:ROW_WOUT + 1, H:2 * H]          # (1, H)
    b_out = p_ref[ROW_WOUT:ROW_WOUT + 1, 2 * H:2 * H + 1]  # (1, 1)
    out_ref[...] = jnp.sum(feat * w_out, axis=-1, keepdims=True) + b_out         # (BS, 1)


def pack_params(params):
    """Fold + pack all parameters (plus the constant temporal encoding and attention mask)
    into one contiguous f32 slab (done once, off the hot path)."""
    scale = 1.0 / math.sqrt(H)
    slab = jnp.zeros((TOTAL_ROWS, W3), jnp.float32)
    # header
    slab = slab.at[ROW_WIN:ROW_WIN + F, 0:H].set(params['w_in'])
    slab = slab.at[ROW_WOUT, H:2 * H].set(params['w_out'][:, 0])
    slab = slab.at[ROW_WOUT, 2 * H].set(params['b_out'][0, 0])
    t = jnp.broadcast_to(jnp.linspace(0.0, 1.0, S, dtype=jnp.float32), (B, S))
    tb = (temporal_encoding(t) + params['b_in']).reshape(BS, H)
    slab = slab.at[ROW_TB:ROW_TB + BS, 0:H].set(tb)
    mask = jnp.kron(jnp.eye(B, dtype=jnp.float32), jnp.ones((S, S), jnp.float32))
    slab = slab.at[ROW_TB:ROW_TB + BS, 2 * H:2 * H + BS].set(mask)
    # layers
    for l in range(L):
        base = LAYER0 + l * LAYER_STRIDE
        wq = params['wq'][l] * scale                       # fold 1/sqrt(H) into q projection
        bq = params['bq'][l] * scale
        wvo = params['wv'][l] @ params['wo'][l]            # fold out-proj into v projection
        bvo = params['bv'][l] @ params['wo'][l] + params['bo'][l]
        wqkv = jnp.concatenate([wq, params['wk'][l], wvo], axis=1)     # (H, 3H)
        bqkv = jnp.concatenate([bq, params['bk'][l], bvo], axis=1)     # (1, 3H)
        w2p = 0.1 * (params['w2'][l] @ params['p_curl'])   # fold 0.1 * curl-diff into w2/b2
        b2p = 0.1 * (params['b2'][l] @ params['p_curl'])
        slab = slab.at[base + OFF_WQKV: base + OFF_WQKV + H, :].set(wqkv)
        slab = slab.at[base + OFF_BQKV, :].set(bqkv[0])
        slab = slab.at[base + OFF_BMLP, 0:CH].set(params['b1'][l][0])
        slab = slab.at[base + OFF_BMLP, 2 * H:3 * H].set(b2p[0])
        slab = slab.at[base + OFF_W1: base + OFF_W1 + H, 0:CH].set(params['w1'][l])
        slab = slab.at[base + OFF_W2: base + OFF_W2 + CH, 2 * H:3 * H].set(w2p)
    return slab


def se3_contiformer_forward(x, slab):
    """x: (B, n_features, seq_length) -> (B, 1).  Single pallas_call, no grid."""
    # (B, F, S) -> (B, S, F) -> (B*S, F) -> zero-pad feature dim to FP sublanes
    xt = jnp.transpose(x, (0, 2, 1)).astype(jnp.float32).reshape(BS, F)
    x_pad = jnp.pad(xt, ((0, 0), (0, FP - F)))

    out = pl.pallas_call(
        _se3_contiformer_kernel,
        out_shape=jax.ShapeDtypeStruct((BS, 1), jnp.float32),
        in_specs=[pl.BlockSpec(memory_space=pltpu.MemorySpace.VMEM)] * 2,
        out_specs=pl.BlockSpec(memory_space=pltpu.MemorySpace.VMEM),
    )(x_pad, slab)
    # pick the last time step of each sequence (row b*S + S-1) in the wrapper
    return out.reshape(B, S)[:, S - 1:]                   # (B, 1)


def init_params(key):
    keys = jax.random.split(key, 16)

    def nrm(k, shape, scale=0.1):
        return (scale * jax.random.normal(k, shape)).astype(jnp.float32)

    params = dict(
        w_in=nrm(keys[0], (F, H)),   b_in=nrm(keys[1], (1, H)),
        wq=nrm(keys[2], (L, H, H)),  bq=nrm(keys[3], (L, 1, H)),
        wk=nrm(keys[4], (L, H, H)),  bk=nrm(keys[5], (L, 1, H)),
        wv=nrm(keys[6], (L, H, H)),  bv=nrm(keys[7], (L, 1, H)),
        wo=nrm(keys[8], (L, H, H)),  bo=nrm(keys[9], (L, 1, H)),
        w1=nrm(keys[10], (L, H, CH)), b1=nrm(keys[11], (L, 1, CH)),
        w2=nrm(keys[12], (L, CH, H)), b2=nrm(keys[13], (L, 1, H)),
        w_out=nrm(keys[14], (H, 1)), b_out=nrm(keys[15], (1, 1)),
    )
    # cyclic curl-like antisymmetric difference as a matmul: ode[:, i] = psi[:, i-1] - psi[:, i+1]
    idx = jnp.arange(H)
    p = jnp.zeros((H, H), jnp.float32)
    p = p.at[(idx - 1) % H, idx].set(1.0)
    p = p.at[(idx + 1) % H, idx].add(-1.0)
    params['p_curl'] = p
    return params


def reference_forward(x, params):
    """Pure-JAX reference in the original (unfused, unfolded) form."""
    xt = jnp.transpose(x, (0, 2, 1)).astype(jnp.float32)
    t = jnp.broadcast_to(jnp.linspace(0.0, 1.0, S, dtype=jnp.float32), (B, S))
    feat = xt @ params['w_in'] + params['b_in'][0] + temporal_encoding(t)
    for l in range(L):
        q = feat @ params['wq'][l] + params['bq'][l]
        k = feat @ params['wk'][l] + params['bk'][l]
        v = feat @ params['wv'][l] + params['bv'][l]
        scores = jnp.einsum('bqh,bkh->bqk', q, k) / math.sqrt(H)
        attn = jax.nn.softmax(scores, axis=-1)
        ao = jnp.einsum('bqk,bkh->bqh', attn, v) @ params['wo'][l] + params['bo'][l]
        h = jnp.tanh(ao @ params['w1'][l] + params['b1'][l])
        psi = h @ params['w2'][l] + params['b2'][l]
        ode = psi @ params['p_curl']
        feat = (ao + 0.1 * ode) + feat
    return feat[:, -1, :] @ params['w_out'] + params['b_out']


if __name__ == "__main__":
    key = jax.random.PRNGKey(0)
    kx, kp = jax.random.split(key)
    x = jax.random.normal(kx, (B, F, S), dtype=jnp.float32)   # (batch, n_features, seq_length)
    params = init_params(kp)
    slab = pack_params(params)

    out = se3_contiformer_forward(x, slab)
    out = jax.block_until_ready(out)

    ref = reference_forward(x, params)
    assert out.shape == (B, 1), out.shape
    # slightly looser tolerance: approximate EUP reciprocal in the softmax + algebraic
    # weight folds (wo/bo into wv/bv, 0.1*p_curl into w2/b2) introduce ~1e-4-level drift
    assert jnp.allclose(out, ref, atol=2e-3, rtol=2e-3), (out, ref)
    print("KERNEL_OK")
</pallas_src>

<mosaic_0001>
module attributes {stable_mosaic.version = 11 : i64} {
  func.func @_se3_contiformer_kernel(%arg0: memref<16x8xf32, #tpu.memory_space<vmem>>, %arg1: memref<296x192xf32, #tpu.memory_space<vmem>>, %arg2: memref<16x1xf32, #tpu.memory_space<vmem>>) attributes {dimension_semantics = [], scalar_prefetch = 0 : i64, scratch_operands = 0 : i64, tpu.core_type = #tpu.core_type<tc>} {
    %c0 = arith.constant 0 : index
    %c0_0 = arith.constant 0 : index
    %0 = vector.load %arg0[%c0, %c0_0] : memref<16x8xf32, #tpu.memory_space<vmem>>, vector<16x8xf32>
    %c0_1 = arith.constant 0 : index
    %c0_2 = arith.constant 0 : index
    %1 = vector.load %arg1[%c0_1, %c0_2] : memref<296x192xf32, #tpu.memory_space<vmem>>, vector<8x64xf32>
    %c8 = arith.constant 8 : index
    %c0_3 = arith.constant 0 : index
    %2 = vector.load %arg1[%c8, %c0_3] : memref<296x192xf32, #tpu.memory_space<vmem>>, vector<16x64xf32>
    %cst = arith.constant dense<0.000000e+00> : vector<16x64xf32>
    %3 = tpu.matmul %0, %1, %cst {dimension_numbers = #tpu.dot_dimension_numbers<[1], [0], [0], [1], [0, 0, 1, 1], [], []>} : vector<16x8xf32>, vector<8x64xf32>, vector<16x64xf32> -> vector<16x64xf32>
    %4 = arith.addf %3, %2 : vector<16x64xf32>
    %c8_4 = arith.constant 8 : index
    %c128 = arith.constant 128 : index
    %5 = vector.load %arg1[%c8_4, %c128] : memref<296x192xf32, #tpu.memory_space<vmem>>, vector<16x16xf32>
    %c24 = arith.constant 24 : index
    %c0_5 = arith.constant 0 : index
    %6 = vector.load %arg1[%c24, %c0_5] : memref<296x192xf32, #tpu.memory_space<vmem>>, vector<64x192xf32>
    %c88 = arith.constant 88 : index
    %c0_6 = arith.constant 0 : index
    %7 = vector.load %arg1[%c88, %c0_6] : memref<296x192xf32, #tpu.memory_space<vmem>>, vector<1x192xf32>
    %cst_7 = arith.constant dense<0.000000e+00> : vector<16x192xf32>
    %8 = tpu.matmul %4, %6, %cst_7 {dimension_numbers = #tpu.dot_dimension_numbers<[1], [0], [0], [1], [0, 0, 1, 1], [], []>} : vector<16x64xf32>, vector<64x192xf32>, vector<16x192xf32> -> vector<16x192xf32>
    %9 = vector.broadcast %7 : vector<1x192xf32> to vector<16x192xf32>
    %10 = arith.addf %8, %9 : vector<16x192xf32>
    %11 = vector.extract_strided_slice %10 {offsets = [0, 0], sizes = [16, 64], strides = [1, 1]} : vector<16x192xf32> to vector<16x64xf32>
    %12 = vector.extract_strided_slice %10 {offsets = [0, 64], sizes = [16, 64], strides = [1, 1]} : vector<16x192xf32> to vector<16x64xf32>
    %13 = vector.extract_strided_slice %10 {offsets = [0, 128], sizes = [16, 64], strides = [1, 1]} : vector<16x192xf32> to vector<16x64xf32>
    %cst_8 = arith.constant dense<0.000000e+00> : vector<16x16xf32>
    %14 = tpu.matmul %11, %12, %cst_8 {dimension_numbers = #tpu.dot_dimension_numbers<[1], [1], [0], [0], [0, 0, 1, 0], [], []>} : vector<16x64xf32>, vector<16x64xf32>, vector<16x16xf32> -> vector<16x16xf32>
    %15 = arith.mulf %14, %5 : vector<16x16xf32>
    %cst_9 = arith.constant dense<0xFF800000> : vector<16xf32>
    %16 = vector.multi_reduction <maximumf>, %15, %cst_9 [1] : vector<16x16xf32> to vector<16xf32>
    %17 = vector.shape_cast %16 : vector<16xf32> to vector<16x1xf32>
    %18 = vector.broadcast %17 : vector<16x1xf32> to vector<16x16xf32>
    %19 = arith.subf %15, %18 : vector<16x16xf32>
    %20 = math.exp %19 : vector<16x16xf32>
    %21 = arith.mulf %20, %5 : vector<16x16xf32>
    %cst_10 = arith.constant dense<0.000000e+00> : vector<16xf32>
    %22 = vector.multi_reduction <add>, %21, %cst_10 [1] : vector<16x16xf32> to vector<16xf32>
    %23 = vector.shape_cast %22 : vector<16xf32> to vector<16x1xf32>
    %24 = tpu.reciprocal %23 {approx = true} : vector<16x1xf32> -> vector<16x1xf32>
    %25 = vector.broadcast %24 : vector<16x1xf32> to vector<16x16xf32>
    %26 = arith.mulf %21, %25 : vector<16x16xf32>
    %cst_11 = arith.constant dense<0.000000e+00> : vector<16x64xf32>
    %27 = tpu.matmul %26, %13, %cst_11 {dimension_numbers = #tpu.dot_dimension_numbers<[1], [0], [0], [1], [0, 0, 1, 1], [], []>} : vector<16x16xf32>, vector<16x64xf32>, vector<16x64xf32> -> vector<16x64xf32>
    %c96 = arith.constant 96 : index
    %c0_12 = arith.constant 0 : index
    %28 = vector.load %arg1[%c96, %c0_12] : memref<296x192xf32, #tpu.memory_space<vmem>>, vector<64x32xf32>
    %c96_13 = arith.constant 96 : index
    %c128_14 = arith.constant 128 : index
    %29 = vector.load %arg1[%c96_13, %c128_14] : memref<296x192xf32, #tpu.memory_space<vmem>>, vector<32x64xf32>
    %c89 = arith.constant 89 : index
    %c0_15 = arith.constant 0 : index
    %30 = vector.load %arg1[%c89, %c0_15] : memref<296x192xf32, #tpu.memory_space<vmem>>, vector<1x32xf32>
    %c89_16 = arith.constant 89 : index
    %c128_17 = arith.constant 128 : index
    %31 = vector.load %arg1[%c89_16, %c128_17] : memref<296x192xf32, #tpu.memory_space<vmem>>, vector<1x64xf32>
    %cst_18 = arith.constant dense<0.000000e+00> : vector<16x32xf32>
    %32 = tpu.matmul %27, %28, %cst_18 {dimension_numbers = #tpu.dot_dimension_numbers<[1], [0], [0], [1], [0, 0, 1, 1], [], []>} : vector<16x64xf32>, vector<64x32xf32>, vector<16x32xf32> -> vector<16x32xf32>
    %33 = vector.broadcast %30 : vector<1x32xf32> to vector<16x32xf32>
    %34 = arith.addf %32, %33 : vector<16x32xf32>
    %35 = math.tanh %34 : vector<16x32xf32>
    %cst_19 = arith.constant dense<0.000000e+00> : vector<16x64xf32>
    %36 = tpu.matmul %35, %29, %cst_19 {dimension_numbers = #tpu.dot_dimension_numbers<[1], [0], [0], [1], [0, 0, 1, 1], [], []>} : vector<16x32xf32>, vector<32x64xf32>, vector<16x64xf32> -> vector<16x64xf32>
    %37 = vector.broadcast %31 : vector<1x64xf32> to vector<16x64xf32>
    %38 = arith.addf %36, %37 : vector<16x64xf32>
    %39 = arith.addf %4, %27 : vector<16x64xf32>
    %40 = arith.addf %39, %38 : vector<16x64xf32>
    %c160 = arith.constant 160 : index
    %c0_20 = arith.constant 0 : index
    %41 = vector.load %arg1[%c160, %c0_20] : memref<296x192xf32, #tpu.memory_space<vmem>>, vector<64x192xf32>
    %c224 = arith.constant 224 : index
    %c0_21 = arith.constant 0 : index
    %42 = vector.load %arg1[%c224, %c0_21] : memref<296x192xf32, #tpu.memory_space<vmem>>, vector<1x192xf32>
    %cst_22 = arith.constant dense<0.000000e+00> : vector<16x192xf32>
    %43 = tpu.matmul %40, %41, %cst_22 {dimension_numbers = #tpu.dot_dimension_numbers<[1], [0], [0], [1], [0, 0, 1, 1], [], []>} : vector<16x64xf32>, vector<64x192xf32>, vector<16x192xf32> -> vector<16x192xf32>
    %44 = vector.broadcast %42 : vector<1x192xf32> to vector<16x192xf32>
    %45 = arith.addf %43, %44 : vector<16x192xf32>
    %46 = vector.extract_strided_slice %45 {offsets = [0, 0], sizes = [16, 64], strides = [1, 1]} : vector<16x192xf32> to vector<16x64xf32>
    %47 = vector.extract_strided_slice %45 {offsets = [0, 64], sizes = [16, 64], strides = [1, 1]} : vector<16x192xf32> to vector<16x64xf32>
    %48 = vector.extract_strided_slice %45 {offsets = [0, 128], sizes = [16, 64], strides = [1, 1]} : vector<16x192xf32> to vector<16x64xf32>
    %cst_23 = arith.constant dense<0.000000e+00> : vector<16x16xf32>
    %49 = tpu.matmul %46, %47, %cst_23 {dimension_numbers = #tpu.dot_dimension_numbers<[1], [1], [0], [0], [0, 0, 1, 0], [], []>} : vector<16x64xf32>, vector<16x64xf32>, vector<16x16xf32> -> vector<16x16xf32>
    %50 = arith.mulf %49, %5 : vector<16x16xf32>
    %cst_24 = arith.constant dense<0xFF800000> : vector<16xf32>
    %51 = vector.multi_reduction <maximumf>, %50, %cst_24 [1] : vector<16x16xf32> to vector<16xf32>
    %52 = vector.shape_cast %51 : vector<16xf32> to vector<16x1xf32>
    %53 = vector.broadcast %52 : vector<16x1xf32> to vector<16x16xf32>
    %54 = arith.subf %50, %53 : vector<16x16xf32>
    %55 = math.exp %54 : vector<16x16xf32>
    %56 = arith.mulf %55, %5 : vector<16x16xf32>
    %cst_25 = arith.constant dense<0.000000e+00> : vector<16xf32>
    %57 = vector.multi_reduction <add>, %56, %cst_25 [1] : vector<16x16xf32> to vector<16xf32>
    %58 = vector.shape_cast %57 : vector<16xf32> to vector<16x1xf32>
    %59 = tpu.reciprocal %58 {approx = true} : vector<16x1xf32> -> vector<16x1xf32>
    %60 = vector.broadcast %59 : vector<16x1xf32> to vector<16x16xf32>
    %61 = arith.mulf %56, %60 : vector<16x16xf32>
    %cst_26 = arith.constant dense<0.000000e+00> : vector<16x64xf32>
    %62 = tpu.matmul %61, %48, %cst_26 {dimension_numbers = #tpu.dot_dimension_numbers<[1], [0], [0], [1], [0, 0, 1, 1], [], []>} : vector<16x16xf32>, vector<16x64xf32>, vector<16x64xf32> -> vector<16x64xf32>
    %c232 = arith.constant 232 : index
    %c0_27 = arith.constant 0 : index
    %63 = vector.load %arg1[%c232, %c0_27] : memref<296x192xf32, #tpu.memory_space<vmem>>, vector<64x32xf32>
    %c232_28 = arith.constant 232 : index
    %c128_29 = arith.constant 128 : index
    %64 = vector.load %arg1[%c232_28, %c128_29] : memref<296x192xf32, #tpu.memory_space<vmem>>, vector<32x64xf32>
    %c225 = arith.constant 225 : index
    %c0_30 = arith.constant 0 : index
    %65 = vector.load %arg1[%c225, %c0_30] : memref<296x192xf32, #tpu.memory_space<vmem>>, vector<1x32xf32>
    %c225_31 = arith.constant 225 : index
    %c128_32 = arith.constant 128 : index
    %66 = vector.load %arg1[%c225_31, %c128_32] : memref<296x192xf32, #tpu.memory_space<vmem>>, vector<1x64xf32>
    %cst_33 = arith.constant dense<0.000000e+00> : vector<16x32xf32>
    %67 = tpu.matmul %62, %63, %cst_33 {dimension_numbers = #tpu.dot_dimension_numbers<[1], [0], [0], [1], [0, 0, 1, 1], [], []>} : vector<16x64xf32>, vector<64x32xf32>, vector<16x32xf32> -> vector<16x32xf32>
    %68 = vector.broadcast %65 : vector<1x32xf32> to vector<16x32xf32>
    %69 = arith.addf %67, %68 : vector<16x32xf32>
    %70 = math.tanh %69 : vector<16x32xf32>
    %cst_34 = arith.constant dense<0.000000e+00> : vector<16x64xf32>
    %71 = tpu.matmul %70, %64, %cst_34 {dimension_numbers = #tpu.dot_dimension_numbers<[1], [0], [0], [1], [0, 0, 1, 1], [], []>} : vector<16x32xf32>, vector<32x64xf32>, vector<16x64xf32> -> vector<16x64xf32>
    %72 = vector.broadcast %66 : vector<1x64xf32> to vector<16x64xf32>
    %73 = arith.addf %71, %72 : vector<16x64xf32>
    %74 = arith.addf %40, %62 : vector<16x64xf32>
    %75 = arith.addf %74, %73 : vector<16x64xf32>
    %c4 = arith.constant 4 : index
    %c64 = arith.constant 64 : index
    %76 = vector.load %arg1[%c4, %c64] : memref<296x192xf32, #tpu.memory_space<vmem>>, vector<1x64xf32>
    %c4_35 = arith.constant 4 : index
    %c128_36 = arith.constant 128 : index
    %77 = vector.load %arg1[%c4_35, %c128_36] : memref<296x192xf32, #tpu.memory_space<vmem>>, vector<1x1xf32>
    %78 = vector.broadcast %76 : vector<1x64xf32> to vector<16x64xf32>
    %79 = arith.mulf %75, %78 : vector<16x64xf32>
    %cst_37 = arith.constant dense<0.000000e+00> : vector<16xf32>
    %80 = vector.multi_reduction <add>, %79, %cst_37 [1] : vector<16x64xf32> to vector<16xf32>
    %81 = vector.shape_cast %80 : vector<16xf32> to vector<16x1xf32>
    %82 = vector.broadcast %77 : vector<1x1xf32> to vector<16x1xf32>
    %83 = arith.addf %81, %82 : vector<16x1xf32>
    %c0_38 = arith.constant 0 : index
    %c0_39 = arith.constant 0 : index
    %84 = vector.load %arg2[%c0_38, %c0_39] : memref<16x1xf32, #tpu.memory_space<vmem>>, vector<16x1xf32>
    tpu.vector_store %arg2[%c0_38, %c0_39], %83 {strides = array<i32>} : memref<16x1xf32, #tpu.memory_space<vmem>>, vector<16x1xf32>,
    return
  }
}

</mosaic_0001>

<llo_original>
// kernel: tpu_custom_call.1
$region0: #{tpu_custom_call.1}
  #allocation0 [shape = 'u32[]', space=smem, size = 0x4, offset = 0x4, fixed_abs, tag = 'smem constant byte address 0x4 - core index']
  #allocation1 [shape = 'u32[72,128]{1,0:T(1,128)}', space=vmem, size = 0x9000, scoped, tag = 'internal scratch']
  %s0 = inlined_call_operand.vmem [shape: f32[16,8], index: 0, kind: input, shape index: {}]
  %s1 = inlined_call_operand.vmem [shape: f32[296,192], index: 1, kind: input, shape index: {}]
  %s2 = inlined_call_operand.vmem [shape: f32[16,1], index: 2, kind: output, shape index: {}]
  %s3 = sld [smem:[#allocation0]]
  $region18: #{tpu_custom_call.1} parent=0
    _
  %s5 = ssub.s32 1, %s3
  %s6 = scalar_select 0, %s5, %s3
  // Predicated region
  $region2: #{tpu_custom_call.1} parent=0 // pred_check
    _
  $region3: #{tpu_custom_call.1} parent=0 // pred_check_branch
    %8 = sbr.rel (0) target = $region5
  $region4: #{tpu_custom_call.1} parent=0 // pred_region
    _
  $region5: #{tpu_custom_call.1} parent=0 // pred_fallthru
    _
  // Predicated region
  $region6: #{tpu_custom_call.1} parent=0 // pred_check
    _
  $region7: #{tpu_custom_call.1} parent=0 // pred_check_branch
    %10 = sbr.rel (0) target = $region9
  $region8: #{tpu_custom_call.1} parent=0 // pred_region
    _
  $region9: #{tpu_custom_call.1} parent=0 // pred_fallthru
    _
  %v11 = vld [vmem:[%s0] sm:$0xff]
  %v12 = vld [vmem:[%s0 + $0x8] sm:$0xff]
  %v13 = vld [vmem:[%s1] sm:$0xff]
  %v14 = vld [vmem:[%s1 + $0x10] sm:$0xff]
  %v15 = vld [vmem:[%s1 + $0x20] sm:$0xff]
  %vm16 = vcmask 64512
  %v18 = vsel %vm16, %v11, 0
  %v21 = vsel %vm16, %v12, 0
  %23 = vmatpush.msra.mxu0 0.0
  %24 = vmatpush.msra.mxu0 0.0
  %25 = vmatpush.msra.mxu0 0.0
  %26 = vmatpush.msra.mxu0 0.0
  %27 = vmatpush.msra.mxu0 0.0
  %28 = vmatpush.msra.mxu0 0.0
  %29 = vmatpush.msra.mxu0 0.0
  %30 = vmatpush.msra.mxu0 0.0
  %31 = vmatpush.msra.mxu0 0.0
  %32 = vmatpush.msra.mxu0 0.0
  %33 = vmatpush.msra.mxu0 0.0
  %34 = vmatpush.msra.mxu0 0.0
  %35 = vmatpush.msra.mxu0 0.0
  %36 = vmatpush.msra.mxu0 0.0
  %37 = vmatpush.msra.mxu0 0.0
  %38 = vmatpush.msra.mxu0 %v13
  %39 = vmatmul.f32.gmra.mxu0 %v18
  %v40 = vpop.f32.mrf.mxu0
  %v41 = vadd.f32 %v14, %v40
  %42 = vmatmul.f32.gmra.mxu0 %v21
  %v43 = vpop.f32.mrf.mxu0
  %v44 = vadd.f32 %v15, %v43
  %45 = vdwg.mxu0
  %v46 = vld [vmem:[%s1 + $0x18] sm:$0xff]
  %v47 = vld [vmem:[%s1 + $0x28] sm:$0xff]
  %v48 = vld [vmem:[%s1 + $0x30] sm:$0xff]
  %v49 = vld [vmem:[%s1 + $0x38] sm:$0xff]
  %v50 = vld [vmem:[%s1 + $0x40] sm:$0xff]
  %v51 = vld [vmem:[%s1 + $0x48] sm:$0xff]
  %v52 = vld [vmem:[%s1 + $0x50] sm:$0xff]
  %v53 = vld [vmem:[%s1 + $0x58] sm:$0xff]
  %v54 = vld [vmem:[%s1 + $0x60] sm:$0xff]
  %v55 = vld [vmem:[%s1 + $0x68] sm:$0xff]
  %v56 = vld [vmem:[%s1 + $0x70] sm:$0xff]
  %v57 = vld [vmem:[%s1 + $0x78] sm:$0xff]
  %v58 = vld [vmem:[%s1 + $0x80] sm:$0xff]
  %v59 = vld [vmem:[%s1 + $0x88] sm:$0xff]
  %v60 = vld [vmem:[%s1 + $0x90] sm:$0xff]
  %v61 = vld [vmem:[%s1 + $0x98] sm:$0xff]
  %v62 = vld [vmem:[%s1 + $0xa0] sm:$0xff]
  %v63 = vld [vmem:[%s1 + $0xa8] sm:$0xff]
  %s64 = scalar_lea.vmem %s1, 176
  %v65 = vld [vmem:[%s64] ss:$8 sm:$0x3]
  %v67 = vperm.slane %v65, 0
  %v68 = vperm.slane %v65, 1
  %vm71 = vcmask 523264
  %v73 = vsel %vm71, %v41, 0
  %v76 = vsel %vm71, %v44, 0
  %78 = vmatpush.msra.mxu0 0.0
  %79 = vmatpush.msra.mxu0 0.0
  %80 = vmatpush.msra.mxu0 0.0
  %81 = vmatpush.msra.mxu0 0.0
  %82 = vmatpush.msra.mxu0 0.0
  %83 = vmatpush.msra.mxu0 0.0
  %84 = vmatpush.msra.mxu0 0.0
  %85 = vmatpush.msra.mxu0 0.0
  %86 = vmatpush.msra.mxu0 %v62
  %87 = vmatpush.msra.mxu0 %v60
  %88 = vmatpush.msra.mxu0 %v58
  %89 = vmatpush.msra.mxu0 %v56
  %90 = vmatpush.msra.mxu0 %v54
  %91 = vmatpush.msra.mxu0 %v52
  %92 = vmatpush.msra.mxu0 %v50
  %93 = vmatpush.msra.mxu0 %v48
  %94 = vmatmul.f32.gmra.mxu0 %v73
  %v95 = vpop.f32.mrf.mxu0
  %v96 = vadd.f32 %v67, %v95
  %97 = vmatmul.f32.gmra.mxu0 %v76
  %v98 = vpop.f32.mrf.mxu0
  %v99 = vadd.f32 %v67, %v98
  %100 = vdwg.mxu0
  %101 = vmatpush.msra.mxu0 0.0
  %102 = vmatpush.msra.mxu0 0.0
  %103 = vmatpush.msra.mxu0 0.0
  %104 = vmatpush.msra.mxu0 0.0
  %105 = vmatpush.msra.mxu0 0.0
  %106 = vmatpush.msra.mxu0 0.0
  %107 = vmatpush.msra.mxu0 0.0
  %108 = vmatpush.msra.mxu0 0.0
  %109 = vmatpush.msra.mxu0 %v63
  %110 = vmatpush.msra.mxu0 %v61
  %111 = vmatpush.msra.mxu0 %v59
  %112 = vmatpush.msra.mxu0 %v57
  %113 = vmatpush.msra.mxu0 %v55
  %114 = vmatpush.msra.mxu0 %v53
  %115 = vmatpush.msra.mxu0 %v51
  %116 = vmatpush.msra.mxu0 %v49
  %117 = vmatmul.f32.gmra.mxu0 %v73
  %v118 = vpop.f32.mrf.mxu0
  %v119 = vadd.f32 %v68, %v118
  %120 = vmatmul.f32.gmra.mxu0 %v76
  %v121 = vpop.f32.mrf.mxu0
  %v122 = vadd.f32 %v68, %v121
  %123 = vdwg.mxu0
  %126 = vrot.lane.b32.xlu0 %v96, 64
  %v127 = vpop.permute.xlu0 %126
  %128 = vrot.lane.b32.xlu0 %v99, 64
  %v129 = vpop.permute.xlu0 %128
  %v130 = vsel %vm71, %v96, 0
  %v132 = vsel %vm71, %v99, 0
  %v134 = vsel %vm71, %v127, 0
  %v136 = vsel %vm71, %v129, 0
  %138 = vmatpush.xpose.msra.mxu0 0.0
  %139 = vmatpush.xpose.msra.mxu0 0.0
  %140 = vmatpush.xpose.msra.mxu0 0.0
  %141 = vmatpush.xpose.msra.mxu0 0.0
  %142 = vmatpush.xpose.msra.mxu0 0.0
  %143 = vmatpush.xpose.msra.mxu0 0.0
  %144 = vmatpush.xpose.msra.mxu0 0.0
  %145 = vmatpush.xpose.msra.mxu0 0.0
  %146 = vmatpush.xpose.msra.mxu0 0.0
  %147 = vmatpush.xpose.msra.mxu0 0.0
  %148 = vmatpush.xpose.msra.mxu0 0.0
  %149 = vmatpush.xpose.msra.mxu0 0.0
  %150 = vmatpush.xpose.msra.mxu0 0.0
  %151 = vmatpush.xpose.msra.mxu0 0.0
  %152 = vmatpush.xpose.msra.mxu0 %v136
  %153 = vmatpush.xpose.msra.mxu0 %v134
  %154 = vmatmul.f32.gmra.mxu0 %v130
  %v155 = vpop.f32.mrf.mxu0
  %v156 = vadd.f32 0.0, %v155
  %157 = vmatmul.f32.gmra.mxu0 %v132
  %v158 = vpop.f32.mrf.mxu0
  %v159 = vadd.f32 0.0, %v158
  %160 = vdwg.mxu0
  %v161 = vmul.f32 %v156, %v46
  %v162 = vmul.f32 %v159, %v47
  %vm163 = vcmask 130048
  %v164 = vsel %vm163, %v161, -inf
  %165 = vmax.xlane.f32.xlu0 %v164
  %v166 = vpop.xlane.xlu0 %165
  %v167 = vsel %vm163, %v162, -inf
  %168 = vmax.xlane.f32.xlu0 %v167
  %v169 = vpop.xlane.xlu0 %168
  %v170 = vsub.f32 %v161, %v166
  %v171 = vsub.f32 %v162, %v169
  %v172 = vmul.f32 %v170, 1.442695
  %v173 = vpow.pop %v172
  %v174 = vmul.f32 %v171, 1.442695
  %v175 = vpow.pop %v174
  %v176 = vmul.f32 %v173, %v46
  %v177 = vmul.f32 %v175, %v47
  %v178 = vsel %vm163, %v176, 0.0
  %179 = vadd.xlane.f32.xlu0 %v178
  %v180 = vpop.xlane.xlu0 %179
  %v181 = vsel %vm163, %v177, 0.0
  %182 = vadd.xlane.f32.xlu0 %v181
  %v183 = vpop.xlane.xlu0 %182
  %v184 = vrcp.pop %v180
  %v185 = vrcp.pop %v183
  %v186 = vmul.f32 %v176, %v184
  %v187 = vmul.f32 %v177, %v185
  %v189 = vsel %vm163, %v186, 0
  %v192 = vsel %vm163, %v187, 0
  %194 = vmatpush.msra.mxu0 0.0
  %195 = vmatpush.msra.mxu0 0.0
  %196 = vmatpush.msra.mxu0 0.0
  %197 = vmatpush.msra.mxu0 0.0
  %198 = vmatpush.msra.mxu0 0.0
  %199 = vmatpush.msra.mxu0 0.0
  %200 = vmatpush.msra.mxu0 0.0
  %201 = vmatpush.msra.mxu0 0.0
  %202 = vmatpush.msra.mxu0 0.0
  %203 = vmatpush.msra.mxu0 0.0
  %204 = vmatpush.msra.mxu0 0.0
  %205 = vmatpush.msra.mxu0 0.0
  %206 = vmatpush.msra.mxu0 0.0
  %207 = vmatpush.msra.mxu0 0.0
  %208 = vmatpush.msra.mxu0 %v122
  %209 = vmatpush.msra.mxu0 %v119
  %210 = vmatmul.f32.gmra.mxu0 %v189
  %v211 = vpop.f32.mrf.mxu0
  %v212 = vadd.f32 0.0, %v211
  %213 = vmatmul.f32.gmra.mxu0 %v192
  %v214 = vpop.f32.mrf.mxu0
  %v215 = vadd.f32 0.0, %v214
  %216 = vdwg.mxu0
  %v217 = vld [vmem:[%s1 + $0xc0] sm:$0xff]
  %v218 = vld [vmem:[%s1 + $0xd0] sm:$0xff]
  %v219 = vld [vmem:[%s1 + $0xe0] sm:$0xff]
  %v220 = vld [vmem:[%s1 + $0xf0] sm:$0xff]
  %v221 = vld [vmem:[%s1 + $0x100] sm:$0xff]
  %v222 = vld [vmem:[%s1 + $0x110] sm:$0xff]
  %v223 = vld [vmem:[%s1 + $0x120] sm:$0xff]
  %v224 = vld [vmem:[%s1 + $0x130] sm:$0xff]
  %v225 = vld [vmem:[%s1 + $0xc8] sm:$0xff]
  %v226 = vld [vmem:[%s1 + $0xd8] sm:$0xff]
  %v227 = vld [vmem:[%s1 + $0xe8] sm:$0xff]
  %v228 = vld [vmem:[%s1 + $0xf8] sm:$0xff]
  %v229 = vld [vmem:[%s1 + $0xb1] ss:$0 sm:$0xff]
  %v230 = vld [vmem:[%s1 + $0xb9] ss:$0 sm:$0xff]
  %v232 = vsel %vm71, %v212, 0
  %v235 = vsel %vm71, %v215, 0
  %237 = vmatpush.msra.mxu0 0.0
  %238 = vmatpush.msra.mxu0 0.0
  %239 = vmatpush.msra.mxu0 0.0
  %240 = vmatpush.msra.mxu0 0.0
  %241 = vmatpush.msra.mxu0 0.0
  %242 = vmatpush.msra.mxu0 0.0
  %243 = vmatpush.msra.mxu0 0.0
  %244 = vmatpush.msra.mxu0 0.0
  %245 = vmatpush.msra.mxu0 %v224
  %246 = vmatpush.msra.mxu0 %v223
  %247 = vmatpush.msra.mxu0 %v222
  %248 = vmatpush.msra.mxu0 %v221
  %249 = vmatpush.msra.mxu0 %v220
  %250 = vmatpush.msra.mxu0 %v219
  %251 = vmatpush.msra.mxu0 %v218
  %252 = vmatpush.msra.mxu0 %v217
  %253 = vmatmul.f32.gmra.mxu0 %v232
  %v254 = vpop.f32.mrf.mxu0
  %v255 = vadd.f32 %v229, %v254
  %256 = vmatmul.f32.gmra.mxu0 %v235
  %v257 = vpop.f32.mrf.mxu0
  %v258 = vadd.f32 %v229, %v257
  %259 = vdwg.mxu0
  %v260 = vtanh.pop %v255
  %v261 = vtanh.pop %v258
  %vm262 = vcmask 261120
  %v264 = vsel %vm262, %v260, 0
  %v267 = vsel %vm262, %v261, 0
  %269 = vmatpush.msra.mxu0 0.0
  %270 = vmatpush.msra.mxu0 0.0
  %271 = vmatpush.msra.mxu0 0.0
  %272 = vmatpush.msra.mxu0 0.0
  %273 = vmatpush.msra.mxu0 0.0
  %274 = vmatpush.msra.mxu0 0.0
  %275 = vmatpush.msra.mxu0 0.0
  %276 = vmatpush.msra.mxu0 0.0
  %277 = vmatpush.msra.mxu0 0.0
  %278 = vmatpush.msra.mxu0 0.0
  %279 = vmatpush.msra.mxu0 0.0
  %280 = vmatpush.msra.mxu0 0.0
  %281 = vmatpush.msra.mxu0 %v228
  %282 = vmatpush.msra.mxu0 %v227
  %283 = vmatpush.msra.mxu0 %v226
  %284 = vmatpush.msra.mxu0 %v225
  %285 = vmatmul.f32.gmra.mxu0 %v264
  %v286 = vpop.f32.mrf.mxu0
  %v287 = vadd.f32 %v230, %v286
  %288 = vmatmul.f32.gmra.mxu0 %v267
  %v289 = vpop.f32.mrf.mxu0
  %v290 = vadd.f32 %v230, %v289
  %291 = vdwg.mxu0
  %v292 = vadd.f32 %v41, %v212
  %v293 = vadd.f32 %v44, %v215
  %v294 = vadd.f32 %v292, %v287
  %v295 = vadd.f32 %v293, %v290
  %v296 = vld [vmem:[%s1 + $0x140] sm:$0xff]
  %v297 = vld [vmem:[%s1 + $0x148] sm:$0xff]
  %v298 = vld [vmem:[%s1 + $0x150] sm:$0xff]
  %v299 = vld [vmem:[%s1 + $0x158] sm:$0xff]
  %v300 = vld [vmem:[%s1 + $0x160] sm:$0xff]
  %v301 = vld [vmem:[%s1 + $0x168] sm:$0xff]
  %v302 = vld [vmem:[%s1 + $0x170] sm:$0xff]
  %v303 = vld [vmem:[%s1 + $0x178] sm:$0xff]
  %v304 = vld [vmem:[%s1 + $0x180] sm:$0xff]
  %v305 = vld [vmem:[%s1 + $0x188] sm:$0xff]
  %v306 = vld [vmem:[%s1 + $0x190] sm:$0xff]
  %v307 = vld [vmem:[%s1 + $0x198] sm:$0xff]
  %v308 = vld [vmem:[%s1 + $0x1a0] sm:$0xff]
  %v309 = vld [vmem:[%s1 + $0x1a8] sm:$0xff]
  %v310 = vld [vmem:[%s1 + $0x1b0] sm:$0xff]
  %v311 = vld [vmem:[%s1 + $0x1b8] sm:$0xff]
  %s312 = scalar_lea.vmem %s1, 448
  %v313 = vld [vmem:[%s312] ss:$8 sm:$0x3]
  %v315 = vperm.slane %v313, 0
  %v316 = vperm.slane %v313, 1
  %v320 = vsel %vm71, %v294, 0
  %v323 = vsel %vm71, %v295, 0
  %325 = vmatpush.msra.mxu0 0.0
  %326 = vmatpush.msra.mxu0 0.0
  %327 = vmatpush.msra.mxu0 0.0
  %328 = vmatpush.msra.mxu0 0.0
  %329 = vmatpush.msra.mxu0 0.0
  %330 = vmatpush.msra.mxu0 0.0
  %331 = vmatpush.msra.mxu0 0.0
  %332 = vmatpush.msra.mxu0 0.0
  %333 = vmatpush.msra.mxu0 %v310
  %334 = vmatpush.msra.mxu0 %v308
  %335 = vmatpush.msra.mxu0 %v306
  %336 = vmatpush.msra.mxu0 %v304
  %337 = vmatpush.msra.mxu0 %v302
  %338 = vmatpush.msra.mxu0 %v300
  %339 = vmatpush.msra.mxu0 %v298
  %340 = vmatpush.msra.mxu0 %v296
  %341 = vmatmul.f32.gmra.mxu0 %v320
  %v342 = vpop.f32.mrf.mxu0
  %v343 = vadd.f32 %v315, %v342
  %344 = vmatmul.f32.gmra.mxu0 %v323
  %v345 = vpop.f32.mrf.mxu0
  %v346 = vadd.f32 %v315, %v345
  %347 = vdwg.mxu0
  %348 = vmatpush.msra.mxu0 0.0
  %349 = vmatpush.msra.mxu0 0.0
  %350 = vmatpush.msra.mxu0 0.0
  %351 = vmatpush.msra.mxu0 0.0
  %352 = vmatpush.msra.mxu0 0.0
  %353 = vmatpush.msra.mxu0 0.0
  %354 = vmatpush.msra.mxu0 0.0
  %355 = vmatpush.msra.mxu0 0.0
  %356 = vmatpush.msra.mxu0 %v311
  %357 = vmatpush.msra.mxu0 %v309
  %358 = vmatpush.msra.mxu0 %v307
  %359 = vmatpush.msra.mxu0 %v305
  %360 = vmatpush.msra.mxu0 %v303
  %361 = vmatpush.msra.mxu0 %v301
  %362 = vmatpush.msra.mxu0 %v299
  %363 = vmatpush.msra.mxu0 %v297
  %364 = vmatmul.f32.gmra.mxu0 %v320
  %v365 = vpop.f32.mrf.mxu0
  %v366 = vadd.f32 %v316, %v365
  %367 = vmatmul.f32.gmra.mxu0 %v323
  %v368 = vpop.f32.mrf.mxu0
  %v369 = vadd.f32 %v316, %v368
  %370 = vdwg.mxu0
  %373 = vrot.lane.b32.xlu0 %v343, 64
  %v374 = vpop.permute.xlu0 %373
  %375 = vrot.lane.b32.xlu0 %v346, 64
  %v376 = vpop.permute.xlu0 %375
  %v377 = vsel %vm71, %v343, 0
  %v379 = vsel %vm71, %v346, 0
  %v381 = vsel %vm71, %v374, 0
  %v383 = vsel %vm71, %v376, 0
  %385 = vmatpush.xpose.msra.mxu0 0.0
  %386 = vmatpush.xpose.msra.mxu0 0.0
  %387 = vmatpush.xpose.msra.mxu0 0.0
  %388 = vmatpush.xpose.msra.mxu0 0.0
  %389 = vmatpush.xpose.msra.mxu0 0.0
  %390 = vmatpush.xpose.msra.mxu0 0.0
  %391 = vmatpush.xpose.msra.mxu0 0.0
  %392 = vmatpush.xpose.msra.mxu0 0.0
  %393 = vmatpush.xpose.msra.mxu0 0.0
  %394 = vmatpush.xpose.msra.mxu0 0.0
  %395 = vmatpush.xpose.msra.mxu0 0.0
  %396 = vmatpush.xpose.msra.mxu0 0.0
  %397 = vmatpush.xpose.msra.mxu0 0.0
  %398 = vmatpush.xpose.msra.mxu0 0.0
  %399 = vmatpush.xpose.msra.mxu0 %v383
  %400 = vmatpush.xpose.msra.mxu0 %v381
  %401 = vmatmul.f32.gmra.mxu0 %v377
  %v402 = vpop.f32.mrf.mxu0
  %v403 = vadd.f32 0.0, %v402
  %404 = vmatmul.f32.gmra.mxu0 %v379
  %v405 = vpop.f32.mrf.mxu0
  %v406 = vadd.f32 0.0, %v405
  %407 = vdwg.mxu0
  %v408 = vmul.f32 %v403, %v46
  %v409 = vmul.f32 %v406, %v47
  %v410 = vsel %vm163, %v408, -inf
  %411 = vmax.xlane.f32.xlu0 %v410
  %v412 = vpop.xlane.xlu0 %411
  %v413 = vsel %vm163, %v409, -inf
  %414 = vmax.xlane.f32.xlu0 %v413
  %v415 = vpop.xlane.xlu0 %414
  %v416 = vsub.f32 %v408, %v412
  %v417 = vsub.f32 %v409, %v415
  %v418 = vmul.f32 %v416, 1.442695
  %v419 = vpow.pop %v418
  %v420 = vmul.f32 %v417, 1.442695
  %v421 = vpow.pop %v420
  %v422 = vmul.f32 %v419, %v46
  %v423 = vmul.f32 %v421, %v47
  %v424 = vsel %vm163, %v422, 0.0
  %425 = vadd.xlane.f32.xlu0 %v424
  %v426 = vpop.xlane.xlu0 %425
  %v427 = vsel %vm163, %v423, 0.0
  %428 = vadd.xlane.f32.xlu0 %v427
  %v429 = vpop.xlane.xlu0 %428
  %v430 = vrcp.pop %v426
  %v431 = vrcp.pop %v429
  %v432 = vmul.f32 %v422, %v430
  %v433 = vmul.f32 %v423, %v431
  %v435 = vsel %vm163, %v432, 0
  %v438 = vsel %vm163, %v433, 0
  %440 = vmatpush.msra.mxu0 0.0
  %441 = vmatpush.msra.mxu0 0.0
  %442 = vmatpush.msra.mxu0 0.0
  %443 = vmatpush.msra.mxu0 0.0
  %444 = vmatpush.msra.mxu0 0.0
  %445 = vmatpush.msra.mxu0 0.0
  %446 = vmatpush.msra.mxu0 0.0
  %447 = vmatpush.msra.mxu0 0.0
  %448 = vmatpush.msra.mxu0 0.0
  %449 = vmatpush.msra.mxu0 0.0
  %450 = vmatpush.msra.mxu0 0.0
  %451 = vmatpush.msra.mxu0 0.0
  %452 = vmatpush.msra.mxu0 0.0
  %453 = vmatpush.msra.mxu0 0.0
  %454 = vmatpush.msra.mxu0 %v369
  %455 = vmatpush.msra.mxu0 %v366
  %456 = vmatmul.f32.gmra.mxu0 %v435
  %v457 = vpop.f32.mrf.mxu0
  %v458 = vadd.f32 0.0, %v457
  %459 = vmatmul.f32.gmra.mxu0 %v438
  %v460 = vpop.f32.mrf.mxu0
  %v461 = vadd.f32 0.0, %v460
  %462 = vdwg.mxu0
  %v463 = vld [vmem:[%s1 + $0x1d0] sm:$0xff]
  %v464 = vld [vmem:[%s1 + $0x1e0] sm:$0xff]
  %v465 = vld [vmem:[%s1 + $0x1f0] sm:$0xff]
  %v466 = vld [vmem:[%s1 + $0x200] sm:$0xff]
  %v467 = vld [vmem:[%s1 + $0x210] sm:$0xff]
  %v468 = vld [vmem:[%s1 + $0x220] sm:$0xff]
  %v469 = vld [vmem:[%s1 + $0x230] sm:$0xff]
  %v470 = vld [vmem:[%s1 + $0x240] sm:$0xff]
  %v471 = vld [vmem:[%s1 + $0x1d8] sm:$0xff]
  %v472 = vld [vmem:[%s1 + $0x1e8] sm:$0xff]
  %v473 = vld [vmem:[%s1 + $0x1f8] sm:$0xff]
  %v474 = vld [vmem:[%s1 + $0x208] sm:$0xff]
  %v475 = vld [vmem:[%s1 + $0x1c1] ss:$0 sm:$0xff]
  %v476 = vld [vmem:[%s1 + $0x1c9] ss:$0 sm:$0xff]
  %v478 = vsel %vm71, %v458, 0
  %v481 = vsel %vm71, %v461, 0
  %483 = vmatpush.msra.mxu0 0.0
  %484 = vmatpush.msra.mxu0 0.0
  %485 = vmatpush.msra.mxu0 0.0
  %486 = vmatpush.msra.mxu0 0.0
  %487 = vmatpush.msra.mxu0 0.0
  %488 = vmatpush.msra.mxu0 0.0
  %489 = vmatpush.msra.mxu0 0.0
  %490 = vmatpush.msra.mxu0 0.0
  %491 = vmatpush.msra.mxu0 %v470
  %492 = vmatpush.msra.mxu0 %v469
  %493 = vmatpush.msra.mxu0 %v468
  %494 = vmatpush.msra.mxu0 %v467
  %495 = vmatpush.msra.mxu0 %v466
  %496 = vmatpush.msra.mxu0 %v465
  %497 = vmatpush.msra.mxu0 %v464
  %498 = vmatpush.msra.mxu0 %v463
  %499 = vmatmul.f32.gmra.mxu0 %v478
  %v500 = vpop.f32.mrf.mxu0
  %v501 = vadd.f32 %v475, %v500
  %502 = vmatmul.f32.gmra.mxu0 %v481
  %v503 = vpop.f32.mrf.mxu0
  %v504 = vadd.f32 %v475, %v503
  %505 = vdwg.mxu0
  %v506 = vtanh.pop %v501
  %v507 = vtanh.pop %v504
  %v509 = vsel %vm262, %v506, 0
  %v512 = vsel %vm262, %v507, 0
  %514 = vmatpush.msra.mxu0 0.0
  %515 = vmatpush.msra.mxu0 0.0
  %516 = vmatpush.msra.mxu0 0.0
  %517 = vmatpush.msra.mxu0 0.0
  %518 = vmatpush.msra.mxu0 0.0
  %519 = vmatpush.msra.mxu0 0.0
  %520 = vmatpush.msra.mxu0 0.0
  %521 = vmatpush.msra.mxu0 0.0
  %522 = vmatpush.msra.mxu0 0.0
  %523 = vmatpush.msra.mxu0 0.0
  %524 = vmatpush.msra.mxu0 0.0
  %525 = vmatpush.msra.mxu0 0.0
  %526 = vmatpush.msra.mxu0 %v474
  %527 = vmatpush.msra.mxu0 %v473
  %528 = vmatpush.msra.mxu0 %v472
  %529 = vmatpush.msra.mxu0 %v471
  %530 = vmatmul.f32.gmra.mxu0 %v509
  %v531 = vpop.f32.mrf.mxu0
  %v532 = vadd.f32 %v476, %v531
  %533 = vmatmul.f32.gmra.mxu0 %v512
  %v534 = vpop.f32.mrf.mxu0
  %v535 = vadd.f32 %v476, %v534
  %536 = vdwg.mxu0
  %v537 = vadd.f32 %v294, %v458
  %v538 = vadd.f32 %v295, %v461
  %v539 = vadd.f32 %v537, %v532
  %v540 = vadd.f32 %v538, %v535
  %v541 = vld [vmem:[%s1 + $0x4] ss:$0 sm:$0xff]
  %v542 = vld [vmem:[%s1 + $0xc] ss:$0 sm:$0xff]
  %544 = vrot.lane.b32.xlu0 %v541, 64
  %v545 = vpop.permute.xlu0 %544
  %v547 = vmul.f32 %v539, %v545
  %v548 = vmul.f32 %v540, %v545
  %v549 = vsel %vm71, %v547, 0.0
  %550 = vadd.xlane.f32.xlu0 %v549
  %v551 = vpop.xlane.xlu0 %550
  %v552 = vsel %vm71, %v548, 0.0
  %553 = vadd.xlane.f32.xlu0 %v552
  %v554 = vpop.xlane.xlu0 %553
  %v555 = vadd.f32 %v551, %v542
  %v556 = vadd.f32 %v554, %v542
  %vm557 = vcmask 7168
  %558 = vst.msk [vmem:[%s2] sm:$0xff] %vm557, %v555
  %559 = vst.msk [vmem:[%s2 + $0x8] sm:$0xff] %vm557, %v556
  // Predicated region
  $region10: #{tpu_custom_call.1} parent=0 // pred_check
    _
  $region11: #{tpu_custom_call.1} parent=0 // pred_check_branch
    %561 = sbr.rel (0) target = $region13
  $region12: #{tpu_custom_call.1} parent=0 // pred_region
    _
  $region13: #{tpu_custom_call.1} parent=0 // pred_fallthru
    _
  // Predicated region
  $region14: #{tpu_custom_call.1} parent=0 // pred_check
    _
  $region15: #{tpu_custom_call.1} parent=0 // pred_check_branch
    %563 = sbr.rel (0) target = $region17
  $region16: #{tpu_custom_call.1} parent=0 // pred_region
    _
  $region17: #{tpu_custom_call.1} parent=0 // pred_fallthru
    _

</llo_original>
